<compile_context>
chip_gen: v7x
topology: tpu7x:2x2x1
jax: 0.10.0
libtpu: 0.0.40
codegen_flags: <defaults>
</compile_context>

<pallas_src>
import jax
import jax.numpy as jnp
from jax.experimental import pallas as pl
from jax.experimental.pallas import tpu as pltpu
import numpy as np


LANE = 128


# ----------------------------- Pallas kernel -----------------------------

def _graph_cluster_kernel(adj_ref, x_ref, fc1w_ref, fc1b_ref, fc2w_ref, fc2b_ref,
                          base_ws_ref, assign_w_ref, o_ref):
    # adj: (Bt, N, N) bf16      x: (Bt, N, Din) f32
    # fc1w: (Din, H1p) bf16     fc1b: (1, H1p) f32
    # fc2w: (H1p, Hp) bf16      fc2b: (1, Hp) f32
    # base_ws: (L, Hp, Hp) bf16 assign_w: (Hp, Zp) bf16     out: (Bt, N, Zp) bf16
    Bt, N, _ = adj_ref.shape
    L, _, Hp = base_ws_ref.shape

    # Normalized adjacency D^{-1}A computed ONCE per block (degree scale folded in, so no
    # per-layer d*y broadcast).  rowsum(A) + 1 == rowsum(A + I) for 0/1 adjacency without
    # self loops, matching the reference.  adj values 0/1 are exact in bf16.
    adj = adj_ref[...].astype(jnp.float32)                       # (Bt, N, N)
    denom = jnp.sum(adj, axis=-1, keepdims=True) + 1.0           # (Bt, N, 1), >= 1
    adj_n = adj * pl.reciprocal(denom, approx=True)              # EUP slot

    def aggregate(hw3):
        # y[b,i,:] = sum_j adj_n[b,i,j] * hw3[b,j,:]
        # N is tiny (<=16 here): do it on the VPU as N broadcast-mul-adds instead of a
        # batched (NxN)@(NxHp) einsum whose K=N would waste the MXU / flood the vex slots.
        y = adj_n[:, :, 0:1] * hw3[:, 0:1, :]
        for j in range(1, N):                                    # static, N is small
            y = y + adj_n[:, :, j:j + 1] * hw3[:, j:j + 1, :]
        return y
    # TODO(synk): for larger N, switch aggregate() to block-diagonal MXU packing (G*N = MXU tile).

    # fc1 / fc2 as lane-dense matmuls over all Bt*N rows; bf16 operands, f32 accumulate.
    x2 = x_ref[...].reshape(Bt * N, x_ref.shape[-1]).astype(jnp.bfloat16)
    h = jax.nn.sigmoid(
        jnp.dot(x2, fc1w_ref[...], preferred_element_type=jnp.float32) + fc1b_ref[...])
    h = jax.nn.sigmoid(
        jnp.dot(h.astype(jnp.bfloat16), fc2w_ref[...],
                preferred_element_type=jnp.float32) + fc2b_ref[...])

    def conv(h2d, w):
        # Hoisted x@W over all Bt*N rows (MXU, bf16), then VPU adjacency aggregation.
        hw = jnp.dot(h2d.astype(jnp.bfloat16), w,
                     preferred_element_type=jnp.float32)         # (Bt*N, O)
        return jnp.tanh(aggregate(hw.reshape(Bt, N, hw.shape[-1])))

    # Base graph-convs: fori_loop with a dynamic weight index bounds the live ranges of the
    # per-conv intermediates (vs. static unroll), keeping VMEM pressure flat as L/block_b grow.
    def body(l, h2d):
        return conv(h2d, base_ws_ref[l]).reshape(Bt * N, Hp)

    h = jax.lax.fori_loop(0, L, body, h)

    o_ref[...] = conv(h, assign_w_ref[...]).astype(o_ref.dtype)  # bf16 writeback


# ----------------------------- wrappers -----------------------------

def _round_up(x, m):
    return ((x + m - 1) // m) * m


def _pad_to(a, shape):
    pads = [(0, t - s) for s, t in zip(a.shape, shape)]
    if all(p == (0, 0) for p in pads):
        return a
    return jnp.pad(a, pads)


def _vmem_config():
    """(vmem_limit_bytes, per-step block budget) per chip generation."""
    kind = ""
    try:
        kind = jax.devices()[0].device_kind.lower()
    except Exception:
        pass
    if "v5" in kind or "v6" in kind:
        # v5e / v6e: 128 MiB physical VMEM -> bigger scoped limit and block budget.
        return 64 * 1024 * 1024, 40 * 1024 * 1024
    # v7x (64 MiB physical VMEM) or unknown: stay conservative.
    return 40 * 1024 * 1024, 20 * 1024 * 1024


def _per_graph_vmem_bytes(Np, Din, Hp, Zp):
    """Conservative per-graph VMEM footprint: double-buffered I/O blocks + live f32 slabs."""
    def tile_bytes(rows, cols, itemsize):
        sub = 16 if itemsize == 2 else 8                  # sublane tile (bf16 / f32)
        return _round_up(rows, sub) * _round_up(max(int(cols), 1), LANE) * itemsize

    adj_b = 2 * tile_bytes(Np, Np, 2)                     # bf16 adj, double-buffered
    x_b = 2 * tile_bytes(Np, Din, 4)                      # f32 X, double-buffered
    out_b = 2 * tile_bytes(Np, Zp, 2)                     # bf16 out, double-buffered
    act_b = 8 * tile_bytes(Np, Hp, 4)                     # ~8 live f32 activation slabs
    return adj_b + x_b + out_b + act_b


def graph_cluster_forward(adj, X, params, *, block_b=None):
    """Forward pass of GraphCluster.

    adj: (B, N, N), X: (B, N, input_dim)  ->  assign: (B, N, z_dim)
    """
    adj = adj.astype(jnp.float32)
    X = X.astype(jnp.float32)
    B, N, Din = X.shape

    fc1_w, fc1_b = params["fc1_w"], params["fc1_b"]
    fc2_w, fc2_b = params["fc2_w"], params["fc2_b"]
    base_ws, assign_w = params["base_ws"], params["assign_w"]
    H1, H, Z = fc1_w.shape[1], fc2_w.shape[1], assign_w.shape[1]
    L = len(base_ws)

    # --- padding: node dim to a multiple of 8 (sublane-aligned reshapes), features to 128 ---
    Np = _round_up(N, 8)
    H1p, Hp, Zp = _round_up(H1, LANE), _round_up(H, LANE), _round_up(Z, LANE)
    if Np != N:  # zero rows/cols are inert (deg of padded row = 0 -> denom = 1, output zeroed)
        adj = jnp.pad(adj, ((0, 0), (0, Np - N), (0, Np - N)))
        X = jnp.pad(X, ((0, 0), (0, Np - N), (0, 0)))

    # Weights zero-padded and cast to bf16 (MXU-native); biases stay f32 (added to f32 accum).
    fc1_wp = _pad_to(fc1_w, (Din, H1p)).astype(jnp.bfloat16)
    fc1_bp = _pad_to(fc1_b.reshape(1, H1), (1, H1p))
    fc2_wp = _pad_to(fc2_w, (H1p, Hp)).astype(jnp.bfloat16)
    fc2_bp = _pad_to(fc2_b.reshape(1, H), (1, Hp))
    base_wp = jnp.stack([_pad_to(w, (Hp, Hp)) for w in base_ws]).astype(jnp.bfloat16)
    assign_wp = _pad_to(assign_w, (Hp, Zp)).astype(jnp.bfloat16)

    adj_bf16 = adj.astype(jnp.bfloat16)   # 0/1 exact in bf16; halves adj HBM/VMEM footprint

    # --- graphs per grid step from the per-chip VMEM budget ---
    vmem_limit, block_budget = _vmem_config()
    per_graph = _per_graph_vmem_bytes(Np, Din, Hp, Zp)
    if block_b is None:
        block_b = int(max(1, min(block_budget // max(per_graph, 1), 1024)))
        if B >= 2:
            # Keep >= 2 grid steps so dimension_semantics=("parallel",) can use both v7x TCs.
            block_b = min(block_b, (B + 1) // 2)
    block_b = int(max(1, min(block_b, max(B, 1))))

    Bp = _round_up(B, block_b)
    if Bp != B:  # zero-pad batch: rowsum=0 -> denom=1, no NaNs; sliced off below
        adj_bf16 = jnp.pad(adj_bf16, ((0, Bp - B), (0, 0), (0, 0)))
        X = jnp.pad(X, ((0, Bp - B), (0, 0), (0, 0)))

    out = pl.pallas_call(
        _graph_cluster_kernel,
        out_shape=jax.ShapeDtypeStruct((Bp, Np, Zp), jnp.bfloat16),
        grid=(Bp // block_b,),
        in_specs=[
            pl.BlockSpec((block_b, Np, Np), lambda i: (i, 0, 0)),
            pl.BlockSpec((block_b, Np, Din), lambda i: (i, 0, 0)),
            pl.BlockSpec((Din, H1p), lambda i: (0, 0)),
            pl.BlockSpec((1, H1p), lambda i: (0, 0)),
            pl.BlockSpec((H1p, Hp), lambda i: (0, 0)),
            pl.BlockSpec((1, Hp), lambda i: (0, 0)),
            pl.BlockSpec((L, Hp, Hp), lambda i: (0, 0, 0)),
            pl.BlockSpec((Hp, Zp), lambda i: (0, 0)),
        ],
        out_specs=pl.BlockSpec((block_b, Np, Zp), lambda i: (i, 0, 0)),
        compiler_params=pltpu.CompilerParams(
            dimension_semantics=("parallel",),
            vmem_limit_bytes=vmem_limit,
        ),
    )(adj_bf16, X, fc1_wp, fc1_bp, fc2_wp, fc2_bp, base_wp, assign_wp)

    return out[:B, :N, :Z].astype(jnp.float32)


def _forward_reference(adj, X, params):
    """Pure-JAX reference matching the PyTorch module semantics (f32)."""
    h = jax.nn.sigmoid(jnp.einsum('bnf,fo->bno', X, params["fc1_w"]) + params["fc1_b"])
    h = jax.nn.sigmoid(jnp.einsum('bnf,fo->bno', h, params["fc2_w"]) + params["fc2_b"])
    d = 1.0 / (jnp.sum(adj, axis=-1, keepdims=True) + 1.0)

    def conv(h, w):
        hw = jnp.einsum('bnf,fo->bno', h, w)
        return jnp.tanh(d * jnp.einsum('bij,bjo->bio', adj, hw))

    for w in params["base_ws"]:
        h = conv(h, w)
    return conv(h, params["assign_w"])


# ----------------------------- parameter init -----------------------------

def glorot_init(key, input_dim, output_dim):
    init_range = np.sqrt(6.0 / (input_dim + output_dim))
    return jax.random.uniform(
        key, (input_dim, output_dim), jnp.float32,
        minval=-init_range, maxval=init_range)


def init_params(key, num_layers, input_dim, hidden_dim, z_dim):
    keys = jax.random.split(key, 4 + num_layers + 1)
    params = {}
    params["fc1_w"] = glorot_init(keys[0], input_dim, 128)
    params["fc1_b"] = jax.random.uniform(keys[1], (128,), jnp.float32,
                                         minval=-0.1, maxval=0.1)
    params["fc2_w"] = glorot_init(keys[2], 128, hidden_dim)
    params["fc2_b"] = jax.random.uniform(keys[3], (hidden_dim,), jnp.float32,
                                         minval=-0.1, maxval=0.1)
    params["base_ws"] = [
        glorot_init(keys[4 + i], hidden_dim, hidden_dim) for i in range(num_layers)
    ]
    params["assign_w"] = glorot_init(keys[4 + num_layers], hidden_dim, z_dim)
    return params


# ----------------------------- main -----------------------------

if __name__ == "__main__":
    num_layers = 3
    input_dim = 4
    hidden_dim = 32
    z_dim = 32
    B, N = 2, 8

    key = jax.random.PRNGKey(0)
    k_adj, k_x, k_p = jax.random.split(key, 3)

    # symmetric 0/1 adjacency without self loops
    a = (jax.random.uniform(k_adj, (B, N, N)) < 0.4).astype(jnp.float32)
    adj = jnp.clip(a + jnp.transpose(a, (0, 2, 1)), 0.0, 1.0)
    eye = jnp.eye(N, dtype=jnp.float32)[None]
    adj = adj * (1.0 - eye)

    X = jax.random.normal(k_x, (B, N, input_dim), jnp.float32)
    params = init_params(k_p, num_layers, input_dim, hidden_dim, z_dim)

    fwd = jax.jit(graph_cluster_forward)
    out = jax.block_until_ready(fwd(adj, X, params))
    ref = jax.block_until_ready(_forward_reference(adj, X, params))

    assert out.shape == (B, N, z_dim)
    assert bool(jnp.all(jnp.isfinite(out)))
    max_err = float(jnp.max(jnp.abs(out - ref)))
    assert max_err < 2e-2, f"mismatch vs reference: max abs err {max_err}"
    print("KERNEL_OK")
</pallas_src>

<mosaic_0001>
module attributes {stable_mosaic.version = 11 : i64} {
  func.func @_graph_cluster_kernel(%arg0: i32, %arg1: memref<1x8x8xbf16, #tpu.memory_space<vmem>>, %arg2: memref<1x8x4xf32, #tpu.memory_space<vmem>>, %arg3: memref<4x128xbf16, #tpu.memory_space<vmem>>, %arg4: memref<1x128xf32, #tpu.memory_space<vmem>>, %arg5: memref<128x128xbf16, #tpu.memory_space<vmem>>, %arg6: memref<1x128xf32, #tpu.memory_space<vmem>>, %arg7: memref<3x128x128xbf16, #tpu.memory_space<vmem>>, %arg8: memref<128x128xbf16, #tpu.memory_space<vmem>>, %arg9: memref<1x8x128xbf16, #tpu.memory_space<vmem>>) attributes {dimension_semantics = [#tpu.dimension_semantics<parallel>], iteration_bounds = array<i64: 2>, scalar_prefetch = 0 : i64, scratch_operands = 0 : i64, tpu.core_type = #tpu.core_type<tc>, window_params = [{transform_indices = @transform_0, window_bounds = array<i64: 1, 8, 8>}, {transform_indices = @transform_1, window_bounds = array<i64: 1, 8, 4>}, {pipeline_mode = #tpu.pipeline_mode<synchronous>, transform_indices = @transform_2, window_bounds = array<i64: 4, 128>}, {pipeline_mode = #tpu.pipeline_mode<synchronous>, transform_indices = @transform_3, window_bounds = array<i64: 1, 128>}, {pipeline_mode = #tpu.pipeline_mode<synchronous>, transform_indices = @transform_4, window_bounds = array<i64: 128, 128>}, {pipeline_mode = #tpu.pipeline_mode<synchronous>, transform_indices = @transform_5, window_bounds = array<i64: 1, 128>}, {pipeline_mode = #tpu.pipeline_mode<synchronous>, transform_indices = @transform_6, window_bounds = array<i64: 3, 128, 128>}, {pipeline_mode = #tpu.pipeline_mode<synchronous>, transform_indices = @transform_7, window_bounds = array<i64: 128, 128>}, {transform_indices = @transform_8, window_bounds = array<i64: 1, 8, 128>}]} {
    %c0 = arith.constant 0 : index
    %c0_0 = arith.constant 0 : index
    %c0_1 = arith.constant 0 : index
    %0 = vector.load %arg1[%c0, %c0_0, %c0_1] : memref<1x8x8xbf16, #tpu.memory_space<vmem>>, vector<1x8x8xbf16>
    %1 = arith.extf %0 : vector<1x8x8xbf16> to vector<1x8x8xf32>
    %cst = arith.constant dense<0.000000e+00> : vector<1x8xf32>
    %2 = vector.multi_reduction <add>, %1, %cst [2] : vector<1x8x8xf32> to vector<1x8xf32>
    %3 = vector.shape_cast %2 : vector<1x8xf32> to vector<1x8x1xf32>
    %cst_2 = arith.constant 1.000000e+00 : f32
    %4 = vector.broadcast %cst_2 : f32 to vector<1x8x1xf32>
    %5 = arith.addf %3, %4 : vector<1x8x1xf32>
    %6 = tpu.reciprocal %5 {approx = true} : vector<1x8x1xf32> -> vector<1x8x1xf32>
    %7 = vector.broadcast %6 : vector<1x8x1xf32> to vector<1x8x8xf32>
    %8 = arith.mulf %1, %7 : vector<1x8x8xf32>
    %c0_3 = arith.constant 0 : index
    %c0_4 = arith.constant 0 : index
    %c0_5 = arith.constant 0 : index
    %9 = vector.load %arg2[%c0_3, %c0_4, %c0_5] : memref<1x8x4xf32, #tpu.memory_space<vmem>>, vector<1x8x4xf32>
    %10 = vector.shape_cast %9 : vector<1x8x4xf32> to vector<8x4xf32>
    %11 = arith.truncf %10 : vector<8x4xf32> to vector<8x4xbf16>
    %c0_6 = arith.constant 0 : index
    %c0_7 = arith.constant 0 : index
    %12 = vector.load %arg3[%c0_6, %c0_7] : memref<4x128xbf16, #tpu.memory_space<vmem>>, vector<4x128xbf16>
    %cst_8 = arith.constant dense<0.000000e+00> : vector<8x128xf32>
    %13 = tpu.matmul %11, %12, %cst_8 {dimension_numbers = #tpu.dot_dimension_numbers<[1], [0], [0], [1], [0, 0, 1, 1], [], []>} : vector<8x4xbf16>, vector<4x128xbf16>, vector<8x128xf32> -> vector<8x128xf32>
    %c0_9 = arith.constant 0 : index
    %c0_10 = arith.constant 0 : index
    %14 = vector.load %arg4[%c0_9, %c0_10] : memref<1x128xf32, #tpu.memory_space<vmem>>, vector<1x128xf32>
    %15 = vector.broadcast %14 : vector<1x128xf32> to vector<8x128xf32>
    %16 = arith.addf %13, %15 : vector<8x128xf32>
    %17 = arith.negf %16 : vector<8x128xf32>
    %18 = math.exp %17 : vector<8x128xf32>
    %cst_11 = arith.constant 1.000000e+00 : f32
    %19 = vector.broadcast %cst_11 : f32 to vector<8x128xf32>
    %20 = arith.addf %19, %18 : vector<8x128xf32>
    %21 = arith.divf %19, %20 : vector<8x128xf32>
    %22 = arith.truncf %21 : vector<8x128xf32> to vector<8x128xbf16>
    %c0_12 = arith.constant 0 : index
    %c0_13 = arith.constant 0 : index
    %23 = vector.load %arg5[%c0_12, %c0_13] : memref<128x128xbf16, #tpu.memory_space<vmem>>, vector<128x128xbf16>
    %cst_14 = arith.constant dense<0.000000e+00> : vector<8x128xf32>
    %24 = tpu.matmul %22, %23, %cst_14 {dimension_numbers = #tpu.dot_dimension_numbers<[1], [0], [0], [1], [0, 0, 1, 1], [], []>} : vector<8x128xbf16>, vector<128x128xbf16>, vector<8x128xf32> -> vector<8x128xf32>
    %c0_15 = arith.constant 0 : index
    %c0_16 = arith.constant 0 : index
    %25 = vector.load %arg6[%c0_15, %c0_16] : memref<1x128xf32, #tpu.memory_space<vmem>>, vector<1x128xf32>
    %26 = vector.broadcast %25 : vector<1x128xf32> to vector<8x128xf32>
    %27 = arith.addf %24, %26 : vector<8x128xf32>
    %28 = arith.negf %27 : vector<8x128xf32>
    %29 = math.exp %28 : vector<8x128xf32>
    %cst_17 = arith.constant 1.000000e+00 : f32
    %30 = vector.broadcast %cst_17 : f32 to vector<8x128xf32>
    %31 = arith.addf %30, %29 : vector<8x128xf32>
    %32 = arith.divf %30, %31 : vector<8x128xf32>
    %c0_i32 = arith.constant 0 : i32
    %c3_i32 = arith.constant 3 : i32
    %33 = arith.addi %c0_i32, %c3_i32 : i32
    %c1_i32 = arith.constant 1 : i32
    %34 = scf.for %arg10 = %c0_i32 to %33 step %c1_i32 iter_args(%arg11 = %32) -> (vector<8x128xf32>)  : i32 {
      %89 = arith.index_cast %arg10 : i32 to index
      %c0_25 = arith.constant 0 : index
      %c0_26 = arith.constant 0 : index
      %90 = vector.load %arg7[%89, %c0_25, %c0_26] : memref<3x128x128xbf16, #tpu.memory_space<vmem>>, vector<1x128x128xbf16>
      %91 = vector.shape_cast %90 : vector<1x128x128xbf16> to vector<128x128xbf16>
      %92 = arith.truncf %arg11 : vector<8x128xf32> to vector<8x128xbf16>
      %cst_27 = arith.constant dense<0.000000e+00> : vector<8x128xf32>
      %93 = tpu.matmul %92, %91, %cst_27 {dimension_numbers = #tpu.dot_dimension_numbers<[1], [0], [0], [1], [0, 0, 1, 1], [], []>} : vector<8x128xbf16>, vector<128x128xbf16>, vector<8x128xf32> -> vector<8x128xf32>
      %94 = vector.shape_cast %93 : vector<8x128xf32> to vector<1x8x128xf32>
      %95 = vector.extract_strided_slice %8 {offsets = [0, 0, 0], sizes = [1, 8, 1], strides = [1, 1, 1]} : vector<1x8x8xf32> to vector<1x8x1xf32>
      %96 = vector.extract_strided_slice %94 {offsets = [0, 0, 0], sizes = [1, 1, 128], strides = [1, 1, 1]} : vector<1x8x128xf32> to vector<1x1x128xf32>
      %97 = vector.broadcast %95 : vector<1x8x1xf32> to vector<1x8x128xf32>
      %98 = vector.broadcast %96 : vector<1x1x128xf32> to vector<1x8x128xf32>
      %99 = arith.mulf %97, %98 : vector<1x8x128xf32>
      %100 = vector.extract_strided_slice %8 {offsets = [0, 0, 1], sizes = [1, 8, 1], strides = [1, 1, 1]} : vector<1x8x8xf32> to vector<1x8x1xf32>
      %101 = vector.extract_strided_slice %94 {offsets = [0, 1, 0], sizes = [1, 1, 128], strides = [1, 1, 1]} : vector<1x8x128xf32> to vector<1x1x128xf32>
      %102 = vector.broadcast %100 : vector<1x8x1xf32> to vector<1x8x128xf32>
      %103 = vector.broadcast %101 : vector<1x1x128xf32> to vector<1x8x128xf32>
      %104 = arith.mulf %102, %103 : vector<1x8x128xf32>
      %105 = arith.addf %99, %104 : vector<1x8x128xf32>
      %106 = vector.extract_strided_slice %8 {offsets = [0, 0, 2], sizes = [1, 8, 1], strides = [1, 1, 1]} : vector<1x8x8xf32> to vector<1x8x1xf32>
      %107 = vector.extract_strided_slice %94 {offsets = [0, 2, 0], sizes = [1, 1, 128], strides = [1, 1, 1]} : vector<1x8x128xf32> to vector<1x1x128xf32>
      %108 = vector.broadcast %106 : vector<1x8x1xf32> to vector<1x8x128xf32>
      %109 = vector.broadcast %107 : vector<1x1x128xf32> to vector<1x8x128xf32>
      %110 = arith.mulf %108, %109 : vector<1x8x128xf32>
      %111 = arith.addf %105, %110 : vector<1x8x128xf32>
      %112 = vector.extract_strided_slice %8 {offsets = [0, 0, 3], sizes = [1, 8, 1], strides = [1, 1, 1]} : vector<1x8x8xf32> to vector<1x8x1xf32>
      %113 = vector.extract_strided_slice %94 {offsets = [0, 3, 0], sizes = [1, 1, 128], strides = [1, 1, 1]} : vector<1x8x128xf32> to vector<1x1x128xf32>
      %114 = vector.broadcast %112 : vector<1x8x1xf32> to vector<1x8x128xf32>
      %115 = vector.broadcast %113 : vector<1x1x128xf32> to vector<1x8x128xf32>
      %116 = arith.mulf %114, %115 : vector<1x8x128xf32>
      %117 = arith.addf %111, %116 : vector<1x8x128xf32>
      %118 = vector.extract_strided_slice %8 {offsets = [0, 0, 4], sizes = [1, 8, 1], strides = [1, 1, 1]} : vector<1x8x8xf32> to vector<1x8x1xf32>
      %119 = vector.extract_strided_slice %94 {offsets = [0, 4, 0], sizes = [1, 1, 128], strides = [1, 1, 1]} : vector<1x8x128xf32> to vector<1x1x128xf32>
      %120 = vector.broadcast %118 : vector<1x8x1xf32> to vector<1x8x128xf32>
      %121 = vector.broadcast %119 : vector<1x1x128xf32> to vector<1x8x128xf32>
      %122 = arith.mulf %120, %121 : vector<1x8x128xf32>
      %123 = arith.addf %117, %122 : vector<1x8x128xf32>
      %124 = vector.extract_strided_slice %8 {offsets = [0, 0, 5], sizes = [1, 8, 1], strides = [1, 1, 1]} : vector<1x8x8xf32> to vector<1x8x1xf32>
      %125 = vector.extract_strided_slice %94 {offsets = [0, 5, 0], sizes = [1, 1, 128], strides = [1, 1, 1]} : vector<1x8x128xf32> to vector<1x1x128xf32>
      %126 = vector.broadcast %124 : vector<1x8x1xf32> to vector<1x8x128xf32>
      %127 = vector.broadcast %125 : vector<1x1x128xf32> to vector<1x8x128xf32>
      %128 = arith.mulf %126, %127 : vector<1x8x128xf32>
      %129 = arith.addf %123, %128 : vector<1x8x128xf32>
      %130 = vector.extract_strided_slice %8 {offsets = [0, 0, 6], sizes = [1, 8, 1], strides = [1, 1, 1]} : vector<1x8x8xf32> to vector<1x8x1xf32>
      %131 = vector.extract_strided_slice %94 {offsets = [0, 6, 0], sizes = [1, 1, 128], strides = [1, 1, 1]} : vector<1x8x128xf32> to vector<1x1x128xf32>
      %132 = vector.broadcast %130 : vector<1x8x1xf32> to vector<1x8x128xf32>
      %133 = vector.broadcast %131 : vector<1x1x128xf32> to vector<1x8x128xf32>
      %134 = arith.mulf %132, %133 : vector<1x8x128xf32>
      %135 = arith.addf %129, %134 : vector<1x8x128xf32>
      %136 = vector.extract_strided_slice %8 {offsets = [0, 0, 7], sizes = [1, 8, 1], strides = [1, 1, 1]} : vector<1x8x8xf32> to vector<1x8x1xf32>
      %137 = vector.extract_strided_slice %94 {offsets = [0, 7, 0], sizes = [1, 1, 128], strides = [1, 1, 1]} : vector<1x8x128xf32> to vector<1x1x128xf32>
      %138 = vector.broadcast %136 : vector<1x8x1xf32> to vector<1x8x128xf32>
      %139 = vector.broadcast %137 : vector<1x1x128xf32> to vector<1x8x128xf32>
      %140 = arith.mulf %138, %139 : vector<1x8x128xf32>
      %141 = arith.addf %135, %140 : vector<1x8x128xf32>
      %142 = math.tanh %141 : vector<1x8x128xf32>
      %143 = vector.shape_cast %142 : vector<1x8x128xf32> to vector<8x128xf32>
      scf.yield %143 : vector<8x128xf32>
    }
    %c3_i32_18 = arith.constant 3 : i32
    %c0_19 = arith.constant 0 : index
    %c0_20 = arith.constant 0 : index
    %35 = vector.load %arg8[%c0_19, %c0_20] : memref<128x128xbf16, #tpu.memory_space<vmem>>, vector<128x128xbf16>
    %36 = arith.truncf %34 : vector<8x128xf32> to vector<8x128xbf16>
    %cst_21 = arith.constant dense<0.000000e+00> : vector<8x128xf32>
    %37 = tpu.matmul %36, %35, %cst_21 {dimension_numbers = #tpu.dot_dimension_numbers<[1], [0], [0], [1], [0, 0, 1, 1], [], []>} : vector<8x128xbf16>, vector<128x128xbf16>, vector<8x128xf32> -> vector<8x128xf32>
    %38 = vector.shape_cast %37 : vector<8x128xf32> to vector<1x8x128xf32>
    %39 = vector.extract_strided_slice %8 {offsets = [0, 0, 0], sizes = [1, 8, 1], strides = [1, 1, 1]} : vector<1x8x8xf32> to vector<1x8x1xf32>
    %40 = vector.extract_strided_slice %38 {offsets = [0, 0, 0], sizes = [1, 1, 128], strides = [1, 1, 1]} : vector<1x8x128xf32> to vector<1x1x128xf32>
    %41 = vector.broadcast %39 : vector<1x8x1xf32> to vector<1x8x128xf32>
    %42 = vector.broadcast %40 : vector<1x1x128xf32> to vector<1x8x128xf32>
    %43 = arith.mulf %41, %42 : vector<1x8x128xf32>
    %44 = vector.extract_strided_slice %8 {offsets = [0, 0, 1], sizes = [1, 8, 1], strides = [1, 1, 1]} : vector<1x8x8xf32> to vector<1x8x1xf32>
    %45 = vector.extract_strided_slice %38 {offsets = [0, 1, 0], sizes = [1, 1, 128], strides = [1, 1, 1]} : vector<1x8x128xf32> to vector<1x1x128xf32>
    %46 = vector.broadcast %44 : vector<1x8x1xf32> to vector<1x8x128xf32>
    %47 = vector.broadcast %45 : vector<1x1x128xf32> to vector<1x8x128xf32>
    %48 = arith.mulf %46, %47 : vector<1x8x128xf32>
    %49 = arith.addf %43, %48 : vector<1x8x128xf32>
    %50 = vector.extract_strided_slice %8 {offsets = [0, 0, 2], sizes = [1, 8, 1], strides = [1, 1, 1]} : vector<1x8x8xf32> to vector<1x8x1xf32>
    %51 = vector.extract_strided_slice %38 {offsets = [0, 2, 0], sizes = [1, 1, 128], strides = [1, 1, 1]} : vector<1x8x128xf32> to vector<1x1x128xf32>
    %52 = vector.broadcast %50 : vector<1x8x1xf32> to vector<1x8x128xf32>
    %53 = vector.broadcast %51 : vector<1x1x128xf32> to vector<1x8x128xf32>
    %54 = arith.mulf %52, %53 : vector<1x8x128xf32>
    %55 = arith.addf %49, %54 : vector<1x8x128xf32>
    %56 = vector.extract_strided_slice %8 {offsets = [0, 0, 3], sizes = [1, 8, 1], strides = [1, 1, 1]} : vector<1x8x8xf32> to vector<1x8x1xf32>
    %57 = vector.extract_strided_slice %38 {offsets = [0, 3, 0], sizes = [1, 1, 128], strides = [1, 1, 1]} : vector<1x8x128xf32> to vector<1x1x128xf32>
    %58 = vector.broadcast %56 : vector<1x8x1xf32> to vector<1x8x128xf32>
    %59 = vector.broadcast %57 : vector<1x1x128xf32> to vector<1x8x128xf32>
    %60 = arith.mulf %58, %59 : vector<1x8x128xf32>
    %61 = arith.addf %55, %60 : vector<1x8x128xf32>
    %62 = vector.extract_strided_slice %8 {offsets = [0, 0, 4], sizes = [1, 8, 1], strides = [1, 1, 1]} : vector<1x8x8xf32> to vector<1x8x1xf32>
    %63 = vector.extract_strided_slice %38 {offsets = [0, 4, 0], sizes = [1, 1, 128], strides = [1, 1, 1]} : vector<1x8x128xf32> to vector<1x1x128xf32>
    %64 = vector.broadcast %62 : vector<1x8x1xf32> to vector<1x8x128xf32>
    %65 = vector.broadcast %63 : vector<1x1x128xf32> to vector<1x8x128xf32>
    %66 = arith.mulf %64, %65 : vector<1x8x128xf32>
    %67 = arith.addf %61, %66 : vector<1x8x128xf32>
    %68 = vector.extract_strided_slice %8 {offsets = [0, 0, 5], sizes = [1, 8, 1], strides = [1, 1, 1]} : vector<1x8x8xf32> to vector<1x8x1xf32>
    %69 = vector.extract_strided_slice %38 {offsets = [0, 5, 0], sizes = [1, 1, 128], strides = [1, 1, 1]} : vector<1x8x128xf32> to vector<1x1x128xf32>
    %70 = vector.broadcast %68 : vector<1x8x1xf32> to vector<1x8x128xf32>
    %71 = vector.broadcast %69 : vector<1x1x128xf32> to vector<1x8x128xf32>
    %72 = arith.mulf %70, %71 : vector<1x8x128xf32>
    %73 = arith.addf %67, %72 : vector<1x8x128xf32>
    %74 = vector.extract_strided_slice %8 {offsets = [0, 0, 6], sizes = [1, 8, 1], strides = [1, 1, 1]} : vector<1x8x8xf32> to vector<1x8x1xf32>
    %75 = vector.extract_strided_slice %38 {offsets = [0, 6, 0], sizes = [1, 1, 128], strides = [1, 1, 1]} : vector<1x8x128xf32> to vector<1x1x128xf32>
    %76 = vector.broadcast %74 : vector<1x8x1xf32> to vector<1x8x128xf32>
    %77 = vector.broadcast %75 : vector<1x1x128xf32> to vector<1x8x128xf32>
    %78 = arith.mulf %76, %77 : vector<1x8x128xf32>
    %79 = arith.addf %73, %78 : vector<1x8x128xf32>
    %80 = vector.extract_strided_slice %8 {offsets = [0, 0, 7], sizes = [1, 8, 1], strides = [1, 1, 1]} : vector<1x8x8xf32> to vector<1x8x1xf32>
    %81 = vector.extract_strided_slice %38 {offsets = [0, 7, 0], sizes = [1, 1, 128], strides = [1, 1, 1]} : vector<1x8x128xf32> to vector<1x1x128xf32>
    %82 = vector.broadcast %80 : vector<1x8x1xf32> to vector<1x8x128xf32>
    %83 = vector.broadcast %81 : vector<1x1x128xf32> to vector<1x8x128xf32>
    %84 = arith.mulf %82, %83 : vector<1x8x128xf32>
    %85 = arith.addf %79, %84 : vector<1x8x128xf32>
    %86 = math.tanh %85 : vector<1x8x128xf32>
    %87 = arith.truncf %86 : vector<1x8x128xf32> to vector<1x8x128xbf16>
    %c0_22 = arith.constant 0 : index
    %c0_23 = arith.constant 0 : index
    %c0_24 = arith.constant 0 : index
    %88 = vector.load %arg9[%c0_22, %c0_23, %c0_24] : memref<1x8x128xbf16, #tpu.memory_space<vmem>>, vector<1x8x128xbf16>
    tpu.vector_store %arg9[%c0_22, %c0_23, %c0_24], %87 {strides = array<i32>} : memref<1x8x128xbf16, #tpu.memory_space<vmem>>, vector<1x8x128xbf16>,
    return
  }
  func.func @transform_0(%arg0: i32) -> (i32, i32, i32) {
    %c0_i32 = arith.constant 0 : i32
    %c0_i32_0 = arith.constant 0 : i32
    %c0_i32_1 = arith.constant 0 : i32
    return %arg0, %c0_i32, %c0_i32_0 : i32, i32, i32
  }
  func.func @transform_1(%arg0: i32) -> (i32, i32, i32) {
    %c0_i32 = arith.constant 0 : i32
    %c0_i32_0 = arith.constant 0 : i32
    %c0_i32_1 = arith.constant 0 : i32
    return %arg0, %c0_i32, %c0_i32_0 : i32, i32, i32
  }
  func.func @transform_2(%arg0: i32) -> (i32, i32) {
    %c0_i32 = arith.constant 0 : i32
    %c0_i32_0 = arith.constant 0 : i32
    %c0_i32_1 = arith.constant 0 : i32
    return %c0_i32, %c0_i32_0 : i32, i32
  }
  func.func @transform_3(%arg0: i32) -> (i32, i32) {
    %c0_i32 = arith.constant 0 : i32
    %c0_i32_0 = arith.constant 0 : i32
    %c0_i32_1 = arith.constant 0 : i32
    return %c0_i32, %c0_i32_0 : i32, i32
  }
  func.func @transform_4(%arg0: i32) -> (i32, i32) {
    %c0_i32 = arith.constant 0 : i32
    %c0_i32_0 = arith.constant 0 : i32
    %c0_i32_1 = arith.constant 0 : i32
    return %c0_i32, %c0_i32_0 : i32, i32
  }
  func.func @transform_5(%arg0: i32) -> (i32, i32) {
    %c0_i32 = arith.constant 0 : i32
    %c0_i32_0 = arith.constant 0 : i32
    %c0_i32_1 = arith.constant 0 : i32
    return %c0_i32, %c0_i32_0 : i32, i32
  }
  func.func @transform_6(%arg0: i32) -> (i32, i32, i32) {
    %c0_i32 = arith.constant 0 : i32
    %c0_i32_0 = arith.constant 0 : i32
    %c0_i32_1 = arith.constant 0 : i32
    %c0_i32_2 = arith.constant 0 : i32
    return %c0_i32, %c0_i32_0, %c0_i32_1 : i32, i32, i32
  }
  func.func @transform_7(%arg0: i32) -> (i32, i32) {
    %c0_i32 = arith.constant 0 : i32
    %c0_i32_0 = arith.constant 0 : i32
    %c0_i32_1 = arith.constant 0 : i32
    return %c0_i32, %c0_i32_0 : i32, i32
  }
  func.func @transform_8(%arg0: i32) -> (i32, i32, i32) {
    %c0_i32 = arith.constant 0 : i32
    %c0_i32_0 = arith.constant 0 : i32
    %c0_i32_1 = arith.constant 0 : i32
    return %arg0, %c0_i32, %c0_i32_0 : i32, i32, i32
  }
}

</mosaic_0001>

<llo_original>
// kernel: graph_cluster_forward.1
$region0: #{graph_cluster_forward.1}
  #allocation0 [shape = 'u32[]', space=smem, size = 0x4, offset = 0x4, fixed_abs, tag = 'smem constant byte address 0x4 - core index']
  #allocation1 [shape = 'u32[144,128]{1,0:T(1,128)}', space=vmem, size = 0x12000, scoped, tag = 'internal scratch']
  %s0 = inlined_call_operand.vmem [shape: bf16[2,8,8], index: 0, kind: input, shape index: {}]
  %s1 = inlined_call_operand.vmem [shape: f32[2,8,4], index: 1, kind: input, shape index: {}]
  %s2 = inlined_call_operand.vmem [shape: bf16[4,128], index: 2, kind: input, shape index: {}]
  %s3 = inlined_call_operand.vmem [shape: f32[1,128], index: 3, kind: input, shape index: {}]
  %s4 = inlined_call_operand.vmem [shape: bf16[128,128], index: 4, kind: input, shape index: {}]
  %s5 = inlined_call_operand.vmem [shape: f32[1,128], index: 5, kind: input, shape index: {}]
  %s6 = inlined_call_operand.vmem [shape: bf16[3,128,128], index: 6, kind: input, shape index: {}]
  %s7 = inlined_call_operand.vmem [shape: bf16[128,128], index: 7, kind: input, shape index: {}]
  %s8 = inlined_call_operand.vmem [shape: bf16[2,8,128], index: 8, kind: output, shape index: {}]
  %s9 = sld [smem:[#allocation0]]
  $region72: #{graph_cluster_forward.1} parent=0
    _
  %s11 = ssub.s32 1, %s9
  %s12 = scalar_select 0, %s11, %s9
  loop: start=0, step=1, limit=4
  $region2: #{graph_cluster_forward.1} parent=0 // loop_pre_header
    _
  $region3: #{graph_cluster_forward.1} parent=0 // loop_header
    %s14 = sphi 0, %s18
    %p15 = scmp.ge.s32.totalorder %s14, 4
    %s24 = sphi 0, %s26
    %s27 = sphi 0, %s24
    %s28 = sphi 0, %s27
    %s44 = sphi 0, %s28
    %s50 = sphi 0, %s52
    %s53 = sphi 0, %s50
    %s54 = sphi 0, %s53
    %s70 = sphi 0, %s54
    %s74 = sphi 0, %s74
    %s76 = sphi 0, %s74
    %s77 = sphi 0, %s76
    %s91 = sphi 0, %s77
    %s95 = sphi 0, %s95
    %s97 = sphi 0, %s95
    %s98 = sphi 0, %s97
    %s112 = sphi 0, %s98
    %s116 = sphi 0, %s116
    %s118 = sphi 0, %s116
    %s119 = sphi 0, %s118
    %s133 = sphi 0, %s119
    %s137 = sphi 0, %s137
    %s139 = sphi 0, %s137
    %s140 = sphi 0, %s139
    %s154 = sphi 0, %s140
    %s158 = sphi 0, %s158
    %s160 = sphi 0, %s158
    %s161 = sphi 0, %s160
    %s175 = sphi 0, %s161
    %s179 = sphi 0, %s179
    %s181 = sphi 0, %s179
    %s182 = sphi 0, %s181
    %s196 = sphi 0, %s182
    %s202 = sphi 0, %s204
    %s205 = sphi 0, %s202
    %s206 = sphi 0, %s205
    %s222 = sphi 0, %s206
  $region4: #{graph_cluster_forward.1} parent=0 // loop_header_branch
    %17 = sbr.rel (%p15) target = $region8
  $region5: #{graph_cluster_forward.1} parent=0 // loop_body
    %s19 = ssub.s32 %s14, 1
    %s20 = ssub.s32 %s14, 2
    %s21 = sadd.s32 %s14, 1
    %s22 = ssub.s32 %s14, %s21
    %p23 = scmp.eq.s32.totalorder %s22, 0
    %s25 = sadd.s32 %s24, 1
    %s26 = scalar_select %p23, %s24, %s25
    %p29 = pneg %p23
    %p30 = scmp.eq.s32.totalorder %s14, 1
    %p31 = por %p29, %p30
    %p32 = scmp.ne.s32.totalorder %s24, %s27
    %p33 = scmp.eq.s32.totalorder %s14, 0
    %p34 = por %p32, %p33
    %p35 = scmp.ne.s32.totalorder %s24, %s27
    %p36 = scmp.eq.s32.totalorder %s19, 1
    %p37 = por %p35, %p36
    %p38 = scmp.ne.s32.totalorder %s27, %s28
    %p39 = scmp.eq.s32.totalorder %s19, 0
    %p40 = por %p38, %p39
    %p41 = scmp.ne.s32.totalorder %s27, %s28
    %p42 = scmp.eq.s32.totalorder %s20, 1
    %p43 = por %p41, %p42
    %p45 = scmp.ne.s32.totalorder %s28, %s44
    %p46 = scmp.eq.s32.totalorder %s20, 0
    %p47 = por %p45, %p46
    %s48 = ssub.s32 %s14, %s21
    %p49 = scmp.eq.s32.totalorder %s48, 0
    %s51 = sadd.s32 %s50, 1
    %s52 = scalar_select %p49, %s50, %s51
    %p55 = pneg %p49
    %p56 = scmp.eq.s32.totalorder %s14, 1
    %p57 = por %p55, %p56
    %p58 = scmp.ne.s32.totalorder %s50, %s53
    %p59 = scmp.eq.s32.totalorder %s14, 0
    %p60 = por %p58, %p59
    %p61 = scmp.ne.s32.totalorder %s50, %s53
    %p62 = scmp.eq.s32.totalorder %s19, 1
    %p63 = por %p61, %p62
    %p64 = scmp.ne.s32.totalorder %s53, %s54
    %p65 = scmp.eq.s32.totalorder %s19, 0
    %p66 = por %p64, %p65
    %p67 = scmp.ne.s32.totalorder %s53, %s54
    %p68 = scmp.eq.s32.totalorder %s20, 1
    %p69 = por %p67, %p68
    %p71 = scmp.ne.s32.totalorder %s54, %s70
    %p72 = scmp.eq.s32.totalorder %s20, 0
    %p73 = por %p71, %p72
    %s75 = sadd.s32 %s74, 1
    %p78 = scmp.eq.s32.totalorder %s14, 1
    %p79 = scmp.ne.s32.totalorder %s74, %s76
    %p80 = scmp.eq.s32.totalorder %s14, 0
    %p81 = por %p79, %p80
    %p82 = scmp.ne.s32.totalorder %s74, %s76
    %p83 = scmp.eq.s32.totalorder %s19, 1
    %p84 = por %p82, %p83
    %p85 = scmp.ne.s32.totalorder %s76, %s77
    %p86 = scmp.eq.s32.totalorder %s19, 0
    %p87 = por %p85, %p86
    %p88 = scmp.ne.s32.totalorder %s76, %s77
    %p89 = scmp.eq.s32.totalorder %s20, 1
    %p90 = por %p88, %p89
    %p92 = scmp.ne.s32.totalorder %s77, %s91
    %p93 = scmp.eq.s32.totalorder %s20, 0
    %p94 = por %p92, %p93
    %s96 = sadd.s32 %s95, 1
    %p99 = scmp.eq.s32.totalorder %s14, 1
    %p100 = scmp.ne.s32.totalorder %s95, %s97
    %p101 = scmp.eq.s32.totalorder %s14, 0
    %p102 = por %p100, %p101
    %p103 = scmp.ne.s32.totalorder %s95, %s97
    %p104 = scmp.eq.s32.totalorder %s19, 1
    %p105 = por %p103, %p104
    %p106 = scmp.ne.s32.totalorder %s97, %s98
    %p107 = scmp.eq.s32.totalorder %s19, 0
    %p108 = por %p106, %p107
    %p109 = scmp.ne.s32.totalorder %s97, %s98
    %p110 = scmp.eq.s32.totalorder %s20, 1
    %p111 = por %p109, %p110
    %p113 = scmp.ne.s32.totalorder %s98, %s112
    %p114 = scmp.eq.s32.totalorder %s20, 0
    %p115 = por %p113, %p114
    %s117 = sadd.s32 %s116, 1
    %p120 = scmp.eq.s32.totalorder %s14, 1
    %p121 = scmp.ne.s32.totalorder %s116, %s118
    %p122 = scmp.eq.s32.totalorder %s14, 0
    %p123 = por %p121, %p122
    %p124 = scmp.ne.s32.totalorder %s116, %s118
    %p125 = scmp.eq.s32.totalorder %s19, 1
    %p126 = por %p124, %p125
    %p127 = scmp.ne.s32.totalorder %s118, %s119
    %p128 = scmp.eq.s32.totalorder %s19, 0
    %p129 = por %p127, %p128
    %p130 = scmp.ne.s32.totalorder %s118, %s119
    %p131 = scmp.eq.s32.totalorder %s20, 1
    %p132 = por %p130, %p131
    %p134 = scmp.ne.s32.totalorder %s119, %s133
    %p135 = scmp.eq.s32.totalorder %s20, 0
    %p136 = por %p134, %p135
    %s138 = sadd.s32 %s137, 1
    %p141 = scmp.eq.s32.totalorder %s14, 1
    %p142 = scmp.ne.s32.totalorder %s137, %s139
    %p143 = scmp.eq.s32.totalorder %s14, 0
    %p144 = por %p142, %p143
    %p145 = scmp.ne.s32.totalorder %s137, %s139
    %p146 = scmp.eq.s32.totalorder %s19, 1
    %p147 = por %p145, %p146
    %p148 = scmp.ne.s32.totalorder %s139, %s140
    %p149 = scmp.eq.s32.totalorder %s19, 0
    %p150 = por %p148, %p149
    %p151 = scmp.ne.s32.totalorder %s139, %s140
    %p152 = scmp.eq.s32.totalorder %s20, 1
    %p153 = por %p151, %p152
    %p155 = scmp.ne.s32.totalorder %s140, %s154
    %p156 = scmp.eq.s32.totalorder %s20, 0
    %p157 = por %p155, %p156
    %s159 = sadd.s32 %s158, 1
    %p162 = scmp.eq.s32.totalorder %s14, 1
    %p163 = scmp.ne.s32.totalorder %s158, %s160
    %p164 = scmp.eq.s32.totalorder %s14, 0
    %p165 = por %p163, %p164
    %p166 = scmp.ne.s32.totalorder %s158, %s160
    %p167 = scmp.eq.s32.totalorder %s19, 1
    %p168 = por %p166, %p167
    %p169 = scmp.ne.s32.totalorder %s160, %s161
    %p170 = scmp.eq.s32.totalorder %s19, 0
    %p171 = por %p169, %p170
    %p172 = scmp.ne.s32.totalorder %s160, %s161
    %p173 = scmp.eq.s32.totalorder %s20, 1
    %p174 = por %p172, %p173
    %p176 = scmp.ne.s32.totalorder %s161, %s175
    %p177 = scmp.eq.s32.totalorder %s20, 0
    %p178 = por %p176, %p177
    %s180 = sadd.s32 %s179, 1
    %p183 = scmp.eq.s32.totalorder %s14, 1
    %p184 = scmp.ne.s32.totalorder %s179, %s181
    %p185 = scmp.eq.s32.totalorder %s14, 0
    %p186 = por %p184, %p185
    %p187 = scmp.ne.s32.totalorder %s179, %s181
    %p188 = scmp.eq.s32.totalorder %s19, 1
    %p189 = por %p187, %p188
    %p190 = scmp.ne.s32.totalorder %s181, %s182
    %p191 = scmp.eq.s32.totalorder %s19, 0
    %p192 = por %p190, %p191
    %p193 = scmp.ne.s32.totalorder %s181, %s182
    %p194 = scmp.eq.s32.totalorder %s20, 1
    %p195 = por %p193, %p194
    %p197 = scmp.ne.s32.totalorder %s182, %s196
    %p198 = scmp.eq.s32.totalorder %s20, 0
    %p199 = por %p197, %p198
    %s200 = ssub.s32 %s14, %s21
    %p201 = scmp.eq.s32.totalorder %s200, 0
    %s203 = sadd.s32 %s202, 1
    %s204 = scalar_select %p201, %s202, %s203
    %p207 = pneg %p201
    %p208 = scmp.eq.s32.totalorder %s14, 1
    %p209 = por %p207, %p208
    %p210 = scmp.ne.s32.totalorder %s202, %s205
    %p211 = scmp.eq.s32.totalorder %s14, 0
    %p212 = por %p210, %p211
    %p213 = scmp.ne.s32.totalorder %s202, %s205
    %p214 = scmp.eq.s32.totalorder %s19, 1
    %p215 = por %p213, %p214
    %p216 = scmp.ne.s32.totalorder %s205, %s206
    %p217 = scmp.eq.s32.totalorder %s19, 0
    %p218 = por %p216, %p217
    %p219 = scmp.ne.s32.totalorder %s205, %s206
    %p220 = scmp.eq.s32.totalorder %s20, 1
    %p221 = por %p219, %p220
    %p223 = scmp.ne.s32.totalorder %s206, %s222
    %p224 = scmp.eq.s32.totalorder %s20, 0
    %p225 = por %p223, %p224
    %p226 = scmp.le.s32.totalorder 1, %s14
    %p227 = scmp.lt.s32.totalorder %s14, 3
    %p228 = pnand %p226, %p227
    %p229 = pneg %p228
    // Predicated region
    $region9: #{graph_cluster_forward.1} parent=5 // pred_check
      _
    $region10: #{graph_cluster_forward.1} parent=5 // pred_check_branch
      %231 = sbr.rel (%p228) target = $region12
    $region11: #{graph_cluster_forward.1} parent=5 // pred_region
      %s232 = ssub.s32 %s14, 1
      // Predicated region
      $region13: #{graph_cluster_forward.1} parent=11 // pred_check
        %p233 = pneg %p87
      $region14: #{graph_cluster_forward.1} parent=11 // pred_check_branch
        %235 = sbr.rel (%p233) target = $region16
      $region15: #{graph_cluster_forward.1} parent=11 // pred_region
        _
      $region16: #{graph_cluster_forward.1} parent=11 // pred_fallthru
        _
      // Predicated region
      $region17: #{graph_cluster_forward.1} parent=11 // pred_check
        %p236 = pneg %p108
      $region18: #{graph_cluster_forward.1} parent=11 // pred_check_branch
        %238 = sbr.rel (%p236) target = $region20
      $region19: #{graph_cluster_forward.1} parent=11 // pred_region
        _
      $region20: #{graph_cluster_forward.1} parent=11 // pred_fallthru
        _
      // Predicated region
      $region21: #{graph_cluster_forward.1} parent=11 // pred_check
        %p239 = pneg %p129
      $region22: #{graph_cluster_forward.1} parent=11 // pred_check_branch
        %241 = sbr.rel (%p239) target = $region24
      $region23: #{graph_cluster_forward.1} parent=11 // pred_region
        _
      $region24: #{graph_cluster_forward.1} parent=11 // pred_fallthru
        _
      // Predicated region
      $region25: #{graph_cluster_forward.1} parent=11 // pred_check
        %p242 = pneg %p150
      $region26: #{graph_cluster_forward.1} parent=11 // pred_check_branch
        %244 = sbr.rel (%p242) target = $region28
      $region27: #{graph_cluster_forward.1} parent=11 // pred_region
        _
      $region28: #{graph_cluster_forward.1} parent=11 // pred_fallthru
        _
      // Predicated region
      $region29: #{graph_cluster_forward.1} parent=11 // pred_check
        %p245 = pneg %p171
      $region30: #{graph_cluster_forward.1} parent=11 // pred_check_branch
        %247 = sbr.rel (%p245) target = $region32
      $region31: #{graph_cluster_forward.1} parent=11 // pred_region
        _
      $region32: #{graph_cluster_forward.1} parent=11 // pred_fallthru
        _
      // Predicated region
      $region33: #{graph_cluster_forward.1} parent=11 // pred_check
        %p248 = pneg %p192
      $region34: #{graph_cluster_forward.1} parent=11 // pred_check_branch
        %250 = sbr.rel (%p248) target = $region36
      $region35: #{graph_cluster_forward.1} parent=11 // pred_region
        _
      $region36: #{graph_cluster_forward.1} parent=11 // pred_fallthru
        _
    $region12: #{graph_cluster_forward.1} parent=5 // pred_fallthru
      _
    %p251 = scmp.lt.s32.totalorder %s14, 2
    // Predicated region
    $region37: #{graph_cluster_forward.1} parent=5 // pred_check
      %p252 = pneg %p251
    $region38: #{graph_cluster_forward.1} parent=5 // pred_check_branch
      %254 = sbr.rel (%p252) target = $region40
    $region39: #{graph_cluster_forward.1} parent=5 // pred_region
      // Predicated region
      $region41: #{graph_cluster_forward.1} parent=39 // pred_check
        %p255 = pneg %p34
      $region42: #{graph_cluster_forward.1} parent=39 // pred_check_branch
        %257 = sbr.rel (%p255) target = $region44
      $region43: #{graph_cluster_forward.1} parent=39 // pred_region
        %p258 = scmp.lt.s32.totalorder %s14, 1
        %s259 = scalar_select %p258, %s14, 1
        %s260 = smul.addr %s259, 4
        %s261 = scalar_lea.vmem %s0, %s260
      $region44: #{graph_cluster_forward.1} parent=39 // pred_fallthru
        _
      // Predicated region
      $region45: #{graph_cluster_forward.1} parent=39 // pred_check
        %p262 = pneg %p60
      $region46: #{graph_cluster_forward.1} parent=39 // pred_check_branch
        %264 = sbr.rel (%p262) target = $region48
      $region47: #{graph_cluster_forward.1} parent=39 // pred_region
        %p265 = scmp.lt.s32.totalorder %s14, 1
        %s266 = scalar_select %p265, %s14, 1
        %s267 = smul.addr %s266, 8
        %s268 = scalar_lea.vmem %s1, %s267
      $region48: #{graph_cluster_forward.1} parent=39 // pred_fallthru
        _
    $region40: #{graph_cluster_forward.1} parent=5 // pred_fallthru
      _
    %p269 = scmp.le.s32.totalorder 1, %s14
    %p270 = scmp.lt.s32.totalorder %s14, 3
    %p271 = pnand %p269, %p270
    %p272 = pneg %p271
    // Predicated region
    $region49: #{graph_cluster_forward.1} parent=5 // pred_check
      _
    $region50: #{graph_cluster_forward.1} parent=5 // pred_check_branch
      %274 = sbr.rel (%p271) target = $region52
    $region51: #{graph_cluster_forward.1} parent=5 // pred_region
      %s275 = ssub.s32 %s14, 1
      %p276 = scmp.lt.s32.totalorder %s19, 1
      %s277 = scalar_select %p276, %s19, 1
      %s278 = smul.addr %s277, 4
      %s279 = scalar_lea.vmem %s0, %s278
      %p280 = pneg %p40
      %p281 = pneg %p37
      %p282 = scmp.lt.s32.totalorder %s19, 1
      %s283 = scalar_select %p282, %s19, 1
      %s284 = smul.addr %s283, 8
      %s285 = scalar_lea.vmem %s1, %s284
      %p286 = pneg %p66
      %p287 = pneg %p63
      %p288 = pneg %p87
      %p289 = pneg %p84
      %p290 = pneg %p108
      %p291 = pneg %p105
      %p292 = pneg %p129
      %p293 = pneg %p126
      %p294 = pneg %p150
      %p295 = pneg %p147
      %p296 = pneg %p171
      %p297 = pneg %p168
      %p298 = pneg %p192
      %p299 = pneg %p189
      %p300 = pneg %p218
      %p301 = pneg %p215
      %p302 = scmp.lt.s32.totalorder %s19, 1
      %s303 = scalar_select %p302, %s19, 1
      %s304 = smul.addr %s303, 4
      %s305 = scalar_lea.vmem %s8, %s304
      %p306 = scmp.lt.s32.totalorder %s19, 1
      %s307 = scalar_select %p306, %s19, 1
      %s308 = smul.addr %s307, 4
      %s309 = scalar_lea.vmem %s0, %s308
      %p310 = scmp.lt.s32.totalorder %s19, 1
      %s311 = scalar_select %p310, %s19, 1
      %s312 = smul.addr %s311, 8
      %s313 = scalar_lea.vmem %s1, %s312
      %p314 = scmp.lt.s32.totalorder %s19, 1
      %s315 = scalar_select %p314, %s19, 1
      %s316 = smul.addr %s315, 4
      %s317 = scalar_lea.vmem %s8, %s316
      %v319 = vld [vmem:[%s309] sm:$0xf]
      %v320 = vunpack.c.l.bf16 %v319
      %vm321 = vcmask 64512
      %v322 = vsel %vm321, %v320, 0.0
      %323 = vadd.xlane.f32.xlu0 %v322
      %v324 = vpop.xlane.xlu0 %323
      %v325 = vadd.f32 %v324, 1.0
      %v326 = vrcp.pop %v325
      %v327 = vmul.f32 %v320, %v326
      %v328 = vld [vmem:[%s313] sm:$0xff]
      %v329 = vpack.c.bf16 %v328, %v328
      %v330 = vld [vmem:[%s2] sm:$0x3]
      %v331 = vld [vmem:[%s3] sm:$0x1]
      %v333 = vlaneseq
      %v334 = vshrl.u32 %v333, 7
      %v335 = vsub.s32 0, %v334
      %v336 = vrot.slane %v331, %v335
      %vm338 = vcmask 31744
      %v340 = vsel %vm338, %v329, 0
      %vm342 = vcmask 1041408
      %v344 = vsel %vm342, %v330, 0
      %346 = vmatprep.subr.bf16.mxu0 0
      %347 = vmatpush1.bf16.msra.mxu0 %v344
      %348 = vmatprep.subr.bf16.mxu0 0
      %349 = vmatpush1.bf16.msra.mxu0 0
      %350 = vmatprep.subr.bf16.mxu0 0
      %351 = vmatpush1.bf16.msra.mxu0 0
      %352 = vmatprep.subr.bf16.mxu0 0
      %353 = vmatpush1.bf16.msra.mxu0 0
      %354 = vmatprep.subr.bf16.mxu0 0
      %355 = vmatpush1.bf16.msra.mxu0 0
      %356 = vmatprep.subr.bf16.mxu0 0
      %357 = vmatpush1.bf16.msra.mxu0 0
      %358 = vmatprep.subr.bf16.mxu0 0
      %359 = vmatpush1.bf16.msra.mxu0 0
      %360 = vmatprep.subr.bf16.mxu0 0
      %361 = vmatpush1.bf16.msra.mxu0 0
      %362 = vmatprep.subr.bf16.mxu0 0
      %363 = vmatpush1.bf16.msra.mxu0 0
      %364 = vmatprep.subr.bf16.mxu0 0
      %365 = vmatpush1.bf16.msra.mxu0 0
      %366 = vmatprep.subr.bf16.mxu0 0
      %367 = vmatpush1.bf16.msra.mxu0 0
      %368 = vmatprep.subr.bf16.mxu0 0
      %369 = vmatpush1.bf16.msra.mxu0 0
      %370 = vmatprep.subr.bf16.mxu0 0
      %371 = vmatpush1.bf16.msra.mxu0 0
      %372 = vmatprep.subr.bf16.mxu0 0
      %373 = vmatpush1.bf16.msra.mxu0 0
      %374 = vmatprep.subr.bf16.mxu0 0
      %375 = vmatpush1.bf16.msra.mxu0 0
      %376 = vmatprep.subr.bf16.mxu0 0
      %377 = vmatpush1.bf16.msra.mxu0 0
      %378 = vmatprep.mubr.bf16.mxu0 0
      %379 = vmatmul.mubr.bf16.gmra.mrb[0].mxu0 %v340
      %v380 = vpop.f32.mrb[0].mxu0
      %v381 = vadd.f32 %v336, %v380
      %v382 = vpop.f32.mrb[0].mxu0
      %v383 = vpop.f32.mrb[0].mxu0
      %v384 = vpop.f32.mrb[0].mxu0
      %385 = vdwg.mxu0
      %v386 = vxor.u32 %v381, 2147483648
      %v387 = vmul.f32 %v386, 1.442695
      %v388 = vpow.pop %v387
      %v389 = vadd.f32 %v388, 1.0
      %v390 = vrcp.pop %v389
      %v391 = vmul.f32 1.0, %v390
      %v392 = vpack.c.bf16 %v391, %v391
      %v393 = vld [vmem:[%s4] sm:$0xf]
      %v394 = vld [vmem:[%s4 + $0x4] sm:$0xf]
      %v395 = vld [vmem:[%s4 + $0x8] sm:$0xf]
      %v396 = vld [vmem:[%s4 + $0xc] sm:$0xf]
      %v397 = vld [vmem:[%s4 + $0x10] sm:$0xf]
      %v398 = vld [vmem:[%s4 + $0x14] sm:$0xf]
      %v399 = vld [vmem:[%s4 + $0x18] sm:$0xf]
      %v400 = vld [vmem:[%s4 + $0x1c] sm:$0xf]
      %v401 = vld [vmem:[%s4 + $0x20] sm:$0xf]
      %v402 = vld [vmem:[%s4 + $0x24] sm:$0xf]
      %v403 = vld [vmem:[%s4 + $0x28] sm:$0xf]
      %v404 = vld [vmem:[%s4 + $0x2c] sm:$0xf]
      %v405 = vld [vmem:[%s4 + $0x30] sm:$0xf]
      %v406 = vld [vmem:[%s4 + $0x34] sm:$0xf]
      %v407 = vld [vmem:[%s4 + $0x38] sm:$0xf]
      %v408 = vld [vmem:[%s4 + $0x3c] sm:$0xf]
      %v409 = vld [vmem:[%s5] sm:$0x1]
      %v411 = vlaneseq
      %v412 = vshrl.u32 %v411, 7
      %v413 = vsub.s32 0, %v412
      %v414 = vrot.slane %v409, %v413
      %v432 = vunpack.c.l.b16 %v393
      %v433 = vunpack.c.l.b16 %v394
      %v434 = vunpack.c.l.b16 %v395
      %v435 = vunpack.c.l.b16 %v396
      %v436 = vunpack.c.l.b16 %v397
      %v437 = vunpack.c.l.b16 %v398
      %v438 = vunpack.c.l.b16 %v399
      %v439 = vunpack.c.l.b16 %v400
      %v440 = vunpack.c.l.b16 %v401
      %v441 = vunpack.c.l.b16 %v402
      %v442 = vunpack.c.l.b16 %v403
      %v443 = vunpack.c.l.b16 %v404
      %v444 = vunpack.c.l.b16 %v405
      %v445 = vunpack.c.l.b16 %v406
      %v446 = vunpack.c.l.b16 %v407
      %v447 = vunpack.c.l.b16 %v408
      %v448 = vpack.c.b16 %v433, %v432
      %v449 = vpack.c.b16 %v435, %v434
      %v450 = vpack.c.b16 %v437, %v436
      %v451 = vpack.c.b16 %v439, %v438
      %v452 = vpack.c.b16 %v441, %v440
      %v453 = vpack.c.b16 %v443, %v442
      %v454 = vpack.c.b16 %v445, %v444
      %v455 = vpack.c.b16 %v447, %v446
      %464 = vmatprep.subr.bf16.mxu0 0
      %465 = vmatpush1.bf16.msra.mxu0 %v448
      %466 = vmatprep.subr.bf16.mxu0 0
      %467 = vmatpush1.bf16.msra.mxu0 %v449
      %468 = vmatprep.subr.bf16.mxu0 0
      %469 = vmatpush1.bf16.msra.mxu0 %v450
      %470 = vmatprep.subr.bf16.mxu0 0
      %471 = vmatpush1.bf16.msra.mxu0 %v451
      %472 = vmatprep.subr.bf16.mxu0 0
      %473 = vmatpush1.bf16.msra.mxu0 %v452
      %474 = vmatprep.subr.bf16.mxu0 0
      %475 = vmatpush1.bf16.msra.mxu0 %v453
      %476 = vmatprep.subr.bf16.mxu0 0
      %477 = vmatpush1.bf16.msra.mxu0 %v454
      %478 = vmatprep.subr.bf16.mxu0 0
      %479 = vmatpush1.bf16.msra.mxu0 %v455
      %480 = vmatprep.subr.bf16.mxu0 0
      %481 = vmatpush1.bf16.msra.mxu0 0
      %482 = vmatprep.subr.bf16.mxu0 0
      %483 = vmatpush1.bf16.msra.mxu0 0
      %484 = vmatprep.subr.bf16.mxu0 0
      %485 = vmatpush1.bf16.msra.mxu0 0
      %486 = vmatprep.subr.bf16.mxu0 0
      %487 = vmatpush1.bf16.msra.mxu0 0
      %488 = vmatprep.subr.bf16.mxu0 0
      %489 = vmatpush1.bf16.msra.mxu0 0
      %490 = vmatprep.subr.bf16.mxu0 0
      %491 = vmatpush1.bf16.msra.mxu0 0
      %492 = vmatprep.subr.bf16.mxu0 0
      %493 = vmatpush1.bf16.msra.mxu0 0
      %494 = vmatprep.subr.bf16.mxu0 0
      %495 = vmatpush1.bf16.msra.mxu0 0
      %496 = vmatprep.mubr.bf16.mxu0 0
      %497 = vmatmul.mubr.bf16.gmra.mrb[0].mxu0 %v392
      %v498 = vpop.f32.mrb[0].mxu0
      %v499 = vadd.f32 %v414, %v498
      %v500 = vpop.f32.mrb[0].mxu0
      %v501 = vpop.f32.mrb[0].mxu0
      %v502 = vpop.f32.mrb[0].mxu0
      %503 = vdwg.mxu0
      %v504 = vxor.u32 %v499, 2147483648
      %v505 = vmul.f32 %v504, 1.442695
      %v506 = vpow.pop %v505
      %v507 = vadd.f32 %v506, 1.0
      %v508 = vrcp.pop %v507
      %v509 = vmul.f32 1.0, %v508
      loop: start=0, step=1, limit=3
      $region53: #{graph_cluster_forward.1} parent=51 // loop_pre_header
        _
      $region54: #{graph_cluster_forward.1} parent=51 // loop_header
        %s511 = sphi 0, %s515
        %p512 = scmp.ge.s32.totalorder %s511, 3
        %v516 = vphi %v509, %v705
      $region55: #{graph_cluster_forward.1} parent=51 // loop_header_branch
        %514 = sbr.rel (%p512) target = $region59
      $region56: #{graph_cluster_forward.1} parent=51 // loop_body
        %s517 = smul.u32 %s511, 16
        %s518 = smul.addr %s517, 4
        %s519 = scalar_lea.vmem %s6, %s518
        %v520 = vld [vmem:[%s519] sm:$0xf]
        %v521 = vld [vmem:[%s519 + $0x4] sm:$0xf]
        %v522 = vld [vmem:[%s519 + $0x8] sm:$0xf]
        %v523 = vld [vmem:[%s519 + $0xc] sm:$0xf]
        %v524 = vld [vmem:[%s519 + $0x10] sm:$0xf]
        %v525 = vld [vmem:[%s519 + $0x14] sm:$0xf]
        %v526 = vld [vmem:[%s519 + $0x18] sm:$0xf]
        %v527 = vld [vmem:[%s519 + $0x1c] sm:$0xf]
        %v528 = vld [vmem:[%s519 + $0x20] sm:$0xf]
        %v529 = vld [vmem:[%s519 + $0x24] sm:$0xf]
        %v530 = vld [vmem:[%s519 + $0x28] sm:$0xf]
        %v531 = vld [vmem:[%s519 + $0x2c] sm:$0xf]
        %v532 = vld [vmem:[%s519 + $0x30] sm:$0xf]
        %v533 = vld [vmem:[%s519 + $0x34] sm:$0xf]
        %v534 = vld [vmem:[%s519 + $0x38] sm:$0xf]
        %v535 = vld [vmem:[%s519 + $0x3c] sm:$0xf]
        %v536 = vpack.c.bf16 %v516, %v516
        %v553 = vunpack.c.l.b16 %v520
        %v554 = vunpack.c.l.b16 %v521
        %v555 = vunpack.c.l.b16 %v522
        %v556 = vunpack.c.l.b16 %v523
        %v557 = vunpack.c.l.b16 %v524
        %v558 = vunpack.c.l.b16 %v525
        %v559 = vunpack.c.l.b16 %v526
        %v560 = vunpack.c.l.b16 %v527
        %v561 = vunpack.c.l.b16 %v528
        %v562 = vunpack.c.l.b16 %v529
        %v563 = vunpack.c.l.b16 %v530
        %v564 = vunpack.c.l.b16 %v531
        %v565 = vunpack.c.l.b16 %v532
        %v566 = vunpack.c.l.b16 %v533
        %v567 = vunpack.c.l.b16 %v534
        %v568 = vunpack.c.l.b16 %v535
        %v569 = vpack.c.b16 %v554, %v553
        %v570 = vpack.c.b16 %v556, %v555
        %v571 = vpack.c.b16 %v558, %v557
        %v572 = vpack.c.b16 %v560, %v559
        %v573 = vpack.c.b16 %v562, %v561
        %v574 = vpack.c.b16 %v564, %v563
        %v575 = vpack.c.b16 %v566, %v565
        %v576 = vpack.c.b16 %v568, %v567
        %585 = vmatprep.subr.bf16.mxu0 0
        %586 = vmatpush1.bf16.msra.mxu0 %v569
        %587 = vmatprep.subr.bf16.mxu0 0
        %588 = vmatpush1.bf16.msra.mxu0 %v570
        %589 = vmatprep.subr.bf16.mxu0 0
        %590 = vmatpush1.bf16.msra.mxu0 %v571
        %591 = vmatprep.subr.bf16.mxu0 0
        %592 = vmatpush1.bf16.msra.mxu0 %v572
        %593 = vmatprep.subr.bf16.mxu0 0
        %594 = vmatpush1.bf16.msra.mxu0 %v573
        %595 = vmatprep.subr.bf16.mxu0 0
        %596 = vmatpush1.bf16.msra.mxu0 %v574
        %597 = vmatprep.subr.bf16.mxu0 0
        %598 = vmatpush1.bf16.msra.mxu0 %v575
        %599 = vmatprep.subr.bf16.mxu0 0
        %600 = vmatpush1.bf16.msra.mxu0 %v576
        %601 = vmatprep.subr.bf16.mxu0 0
        %602 = vmatpush1.bf16.msra.mxu0 0
        %603 = vmatprep.subr.bf16.mxu0 0
        %604 = vmatpush1.bf16.msra.mxu0 0
        %605 = vmatprep.subr.bf16.mxu0 0
        %606 = vmatpush1.bf16.msra.mxu0 0
        %607 = vmatprep.subr.bf16.mxu0 0
        %608 = vmatpush1.bf16.msra.mxu0 0
        %609 = vmatprep.subr.bf16.mxu0 0
        %610 = vmatpush1.bf16.msra.mxu0 0
        %611 = vmatprep.subr.bf16.mxu0 0
        %612 = vmatpush1.bf16.msra.mxu0 0
        %613 = vmatprep.subr.bf16.mxu0 0
        %614 = vmatpush1.bf16.msra.mxu0 0
        %615 = vmatprep.subr.bf16.mxu0 0
        %616 = vmatpush1.bf16.msra.mxu0 0
        %617 = vmatprep.mubr.bf16.mxu0 0
        %618 = vmatmul.mubr.bf16.gmra.mrb[0].mxu0 %v536
        %v619 = vpop.f32.mrb[0].mxu0
        %v620 = vadd.f32 0.0, %v619
        %v621 = vpop.f32.mrb[0].mxu0
        %v622 = vpop.f32.mrb[0].mxu0
        %v623 = vpop.f32.mrb[0].mxu0
        %624 = vdwg.mxu0
        %626 = vset.pattern.permute.xlu0 0
        %627 = vperm.xlu0 %626, %v327
        %v628 = vpop.permute.xlu0 %627
        %v630 = vlaneseq
        %v631 = vshrl.u32 %v630, 7
        %v632 = vsub.s32 0, %v631
        %v633 = vrot.slane %v620, %v632
        %v634 = vmul.f32 %v628, %v633
        %635 = vset.pattern.permute.xlu0 1
        %636 = vperm.xlu0 %635, %v327
        %v637 = vpop.permute.xlu0 %636
        %v639 = vlaneseq
        %v640 = vshrl.u32 %v639, 7
        %v641 = vsub.s32 1, %v640
        %v642 = vrot.slane %v620, %v641
        %v643 = vmul.f32 %v637, %v642
        %v644 = vadd.f32 %v634, %v643
        %645 = vset.pattern.permute.xlu0 2
        %646 = vperm.xlu0 %645, %v327
        %v647 = vpop.permute.xlu0 %646
        %v649 = vlaneseq
        %v650 = vshrl.u32 %v649, 7
        %v651 = vsub.s32 2, %v650
        %v652 = vrot.slane %v620, %v651
        %v653 = vmul.f32 %v647, %v652
        %v654 = vadd.f32 %v644, %v653
        %655 = vset.pattern.permute.xlu0 3
        %656 = vperm.xlu0 %655, %v327
        %v657 = vpop.permute.xlu0 %656
        %v659 = vlaneseq
        %v660 = vshrl.u32 %v659, 7
        %v661 = vsub.s32 3, %v660
        %v662 = vrot.slane %v620, %v661
        %v663 = vmul.f32 %v657, %v662
        %v664 = vadd.f32 %v654, %v663
        %665 = vset.pattern.permute.xlu0 4
        %666 = vperm.xlu0 %665, %v327
        %v667 = vpop.permute.xlu0 %666
        %v669 = vlaneseq
        %v670 = vshrl.u32 %v669, 7
        %v671 = vsub.s32 4, %v670
        %v672 = vrot.slane %v620, %v671
        %v673 = vmul.f32 %v667, %v672
        %v674 = vadd.f32 %v664, %v673
        %675 = vset.pattern.permute.xlu0 5
        %676 = vperm.xlu0 %675, %v327
        %v677 = vpop.permute.xlu0 %676
        %v679 = vlaneseq
        %v680 = vshrl.u32 %v679, 7
        %v681 = vsub.s32 5, %v680
        %v682 = vrot.slane %v620, %v681
        %v683 = vmul.f32 %v677, %v682
        %v684 = vadd.f32 %v674, %v683
        %685 = vset.pattern.permute.xlu0 6
        %686 = vperm.xlu0 %685, %v327
        %v687 = vpop.permute.xlu0 %686
        %v689 = vlaneseq
        %v690 = vshrl.u32 %v689, 7
        %v691 = vsub.s32 6, %v690
        %v692 = vrot.slane %v620, %v691
        %v693 = vmul.f32 %v687, %v692
        %v694 = vadd.f32 %v684, %v693
        %695 = vset.pattern.permute.xlu0 7
        %696 = vperm.xlu0 %695, %v327
        %v697 = vpop.permute.xlu0 %696
        %v699 = vlaneseq
        %v700 = vshrl.u32 %v699, 7
        %v701 = vsub.s32 7, %v700
        %v702 = vrot.slane %v620, %v701
        %v703 = vmul.f32 %v697, %v702
        %v704 = vadd.f32 %v694, %v703
        %v705 = vtanh.pop %v704
      $region57: #{graph_cluster_forward.1} parent=51 // loop_footer
        %s515 = sadd.s32 1, %s511
      $region58: #{graph_cluster_forward.1} parent=51 // loop_footer_branch
        %510 = sbr.rel target = $region54
      $region59: #{graph_cluster_forward.1} parent=51 // loop_exit
        _
      %v706 = vld [vmem:[%s7] sm:$0xf]
      %v707 = vld [vmem:[%s7 + $0x4] sm:$0xf]
      %v708 = vld [vmem:[%s7 + $0x8] sm:$0xf]
      %v709 = vld [vmem:[%s7 + $0xc] sm:$0xf]
      %v710 = vld [vmem:[%s7 + $0x10] sm:$0xf]
      %v711 = vld [vmem:[%s7 + $0x14] sm:$0xf]
      %v712 = vld [vmem:[%s7 + $0x18] sm:$0xf]
      %v713 = vld [vmem:[%s7 + $0x1c] sm:$0xf]
      %v714 = vld [vmem:[%s7 + $0x20] sm:$0xf]
      %v715 = vld [vmem:[%s7 + $0x24] sm:$0xf]
      %v716 = vld [vmem:[%s7 + $0x28] sm:$0xf]
      %v717 = vld [vmem:[%s7 + $0x2c] sm:$0xf]
      %v718 = vld [vmem:[%s7 + $0x30] sm:$0xf]
      %v719 = vld [vmem:[%s7 + $0x34] sm:$0xf]
      %v720 = vld [vmem:[%s7 + $0x38] sm:$0xf]
      %v721 = vld [vmem:[%s7 + $0x3c] sm:$0xf]
      %v722 = vpack.c.bf16 %v516, %v516
      %v739 = vunpack.c.l.b16 %v706
      %v740 = vunpack.c.l.b16 %v707
      %v741 = vunpack.c.l.b16 %v708
      %v742 = vunpack.c.l.b16 %v709
      %v743 = vunpack.c.l.b16 %v710
      %v744 = vunpack.c.l.b16 %v711
      %v745 = vunpack.c.l.b16 %v712
      %v746 = vunpack.c.l.b16 %v713
      %v747 = vunpack.c.l.b16 %v714
      %v748 = vunpack.c.l.b16 %v715
      %v749 = vunpack.c.l.b16 %v716
      %v750 = vunpack.c.l.b16 %v717
      %v751 = vunpack.c.l.b16 %v718
      %v752 = vunpack.c.l.b16 %v719
      %v753 = vunpack.c.l.b16 %v720
      %v754 = vunpack.c.l.b16 %v721
      %v755 = vpack.c.b16 %v740, %v739
      %v756 = vpack.c.b16 %v742, %v741
      %v757 = vpack.c.b16 %v744, %v743
      %v758 = vpack.c.b16 %v746, %v745
      %v759 = vpack.c.b16 %v748, %v747
      %v760 = vpack.c.b16 %v750, %v749
      %v761 = vpack.c.b16 %v752, %v751
      %v762 = vpack.c.b16 %v754, %v753
      %771 = vmatprep.subr.bf16.mxu0 0
      %772 = vmatpush1.bf16.msra.mxu0 %v755
      %773 = vmatprep.subr.bf16.mxu0 0
      %774 = vmatpush1.bf16.msra.mxu0 %v756
      %775 = vmatprep.subr.bf16.mxu0 0
      %776 = vmatpush1.bf16.msra.mxu0 %v757
      %777 = vmatprep.subr.bf16.mxu0 0
      %778 = vmatpush1.bf16.msra.mxu0 %v758
      %779 = vmatprep.subr.bf16.mxu0 0
      %780 = vmatpush1.bf16.msra.mxu0 %v759
      %781 = vmatprep.subr.bf16.mxu0 0
      %782 = vmatpush1.bf16.msra.mxu0 %v760
      %783 = vmatprep.subr.bf16.mxu0 0
      %784 = vmatpush1.bf16.msra.mxu0 %v761
      %785 = vmatprep.subr.bf16.mxu0 0
      %786 = vmatpush1.bf16.msra.mxu0 %v762
      %787 = vmatprep.subr.bf16.mxu0 0
      %788 = vmatpush1.bf16.msra.mxu0 0
      %789 = vmatprep.subr.bf16.mxu0 0
      %790 = vmatpush1.bf16.msra.mxu0 0
      %791 = vmatprep.subr.bf16.mxu0 0
      %792 = vmatpush1.bf16.msra.mxu0 0
      %793 = vmatprep.subr.bf16.mxu0 0
      %794 = vmatpush1.bf16.msra.mxu0 0
      %795 = vmatprep.subr.bf16.mxu0 0
      %796 = vmatpush1.bf16.msra.mxu0 0
      %797 = vmatprep.subr.bf16.mxu0 0
      %798 = vmatpush1.bf16.msra.mxu0 0
      %799 = vmatprep.subr.bf16.mxu0 0
      %800 = vmatpush1.bf16.msra.mxu0 0
      %801 = vmatprep.subr.bf16.mxu0 0
      %802 = vmatpush1.bf16.msra.mxu0 0
      %803 = vmatprep.mubr.bf16.mxu0 0
      %804 = vmatmul.mubr.bf16.gmra.mrb[0].mxu0 %v722
      %v805 = vpop.f32.mrb[0].mxu0
      %v806 = vadd.f32 0.0, %v805
      %v807 = vpop.f32.mrb[0].mxu0
      %v808 = vpop.f32.mrb[0].mxu0
      %v809 = vpop.f32.mrb[0].mxu0
      %810 = vdwg.mxu0
      %812 = vset.pattern.permute.xlu0 0
      %813 = vperm.xlu0 %812, %v327
      %v814 = vpop.permute.xlu0 %813
      %v816 = vlaneseq
      %v817 = vshrl.u32 %v816, 7
      %v818 = vsub.s32 0, %v817
      %v819 = vrot.slane %v806, %v818
      %v820 = vmul.f32 %v814, %v819
      %821 = vset.pattern.permute.xlu0 1
      %822 = vperm.xlu0 %821, %v327
      %v823 = vpop.permute.xlu0 %822
      %v825 = vlaneseq
      %v826 = vshrl.u32 %v825, 7
      %v827 = vsub.s32 1, %v826
      %v828 = vrot.slane %v806, %v827
      %v829 = vmul.f32 %v823, %v828
      %v830 = vadd.f32 %v820, %v829
      %831 = vset.pattern.permute.xlu0 2
      %832 = vperm.xlu0 %831, %v327
      %v833 = vpop.permute.xlu0 %832
      %v835 = vlaneseq
      %v836 = vshrl.u32 %v835, 7
      %v837 = vsub.s32 2, %v836
      %v838 = vrot.slane %v806, %v837
      %v839 = vmul.f32 %v833, %v838
      %v840 = vadd.f32 %v830, %v839
      %841 = vset.pattern.permute.xlu0 3
      %842 = vperm.xlu0 %841, %v327
      %v843 = vpop.permute.xlu0 %842
      %v845 = vlaneseq
      %v846 = vshrl.u32 %v845, 7
      %v847 = vsub.s32 3, %v846
      %v848 = vrot.slane %v806, %v847
      %v849 = vmul.f32 %v843, %v848
      %v850 = vadd.f32 %v840, %v849
      %851 = vset.pattern.permute.xlu0 4
      %852 = vperm.xlu0 %851, %v327
      %v853 = vpop.permute.xlu0 %852
      %v855 = vlaneseq
      %v856 = vshrl.u32 %v855, 7
      %v857 = vsub.s32 4, %v856
      %v858 = vrot.slane %v806, %v857
      %v859 = vmul.f32 %v853, %v858
      %v860 = vadd.f32 %v850, %v859
      %861 = vset.pattern.permute.xlu0 5
      %862 = vperm.xlu0 %861, %v327
      %v863 = vpop.permute.xlu0 %862
      %v865 = vlaneseq
      %v866 = vshrl.u32 %v865, 7
      %v867 = vsub.s32 5, %v866
      %v868 = vrot.slane %v806, %v867
      %v869 = vmul.f32 %v863, %v868
      %v870 = vadd.f32 %v860, %v869
      %871 = vset.pattern.permute.xlu0 6
      %872 = vperm.xlu0 %871, %v327
      %v873 = vpop.permute.xlu0 %872
      %v875 = vlaneseq
      %v876 = vshrl.u32 %v875, 7
      %v877 = vsub.s32 6, %v876
      %v878 = vrot.slane %v806, %v877
      %v879 = vmul.f32 %v873, %v878
      %v880 = vadd.f32 %v870, %v879
      %881 = vset.pattern.permute.xlu0 7
      %882 = vperm.xlu0 %881, %v327
      %v883 = vpop.permute.xlu0 %882
      %v885 = vlaneseq
      %v886 = vshrl.u32 %v885, 7
      %v887 = vsub.s32 7, %v886
      %v888 = vrot.slane %v806, %v887
      %v889 = vmul.f32 %v883, %v888
      %v890 = vadd.f32 %v880, %v889
      %v891 = vtanh.pop %v890
      %v892 = vpack.c.bf16 %v891, %v891
      %893 = vst [vmem:[%s317] sm:$0xf] %v892
      %p894 = scmp.lt.s32.totalorder %s19, 1
      %s895 = scalar_select %p894, %s19, 1
      %s896 = smul.addr %s895, 4
      %s897 = scalar_lea.vmem %s8, %s896
      // Predicated region
      $region60: #{graph_cluster_forward.1} parent=51 // pred_check
        %p898 = pneg %p215
      $region61: #{graph_cluster_forward.1} parent=51 // pred_check_branch
        %900 = sbr.rel (%p898) target = $region63
      $region62: #{graph_cluster_forward.1} parent=51 // pred_region
        _
      $region63: #{graph_cluster_forward.1} parent=51 // pred_fallthru
        _
    $region52: #{graph_cluster_forward.1} parent=5 // pred_fallthru
      _
    %p901 = scmp.le.s32.totalorder 2, %s14
    // Predicated region
    $region64: #{graph_cluster_forward.1} parent=5 // pred_check
      %p902 = pneg %p901
    $region65: #{graph_cluster_forward.1} parent=5 // pred_check_branch
      %904 = sbr.rel (%p902) target = $region67
    $region66: #{graph_cluster_forward.1} parent=5 // pred_region
      %s905 = ssub.s32 %s14, 2
      // Predicated region
      $region68: #{graph_cluster_forward.1} parent=66 // pred_check
        %p906 = pneg %p221
      $region69: #{graph_cluster_forward.1} parent=66 // pred_check_branch
        %908 = sbr.rel (%p906) target = $region71
      $region70: #{graph_cluster_forward.1} parent=66 // pred_region
        %p909 = scmp.lt.s32.totalorder %s20, 1
        %s910 = scalar_select %p909, %s20, 1
        %s911 = smul.addr %s910, 4
        %s912 = scalar_lea.vmem %s8, %s911
      $region71: #{graph_cluster_forward.1} parent=66 // pred_fallthru
        _
    $region67: #{graph_cluster_forward.1} parent=5 // pred_fallthru
      _
  $region6: #{graph_cluster_forward.1} parent=0 // loop_footer
    %s18 = sadd.s32 1, %s14
  $region7: #{graph_cluster_forward.1} parent=0 // loop_footer_branch
    %13 = sbr.rel target = $region3
  $region8: #{graph_cluster_forward.1} parent=0 // loop_exit
    _

</llo_original>
